<compile_context>
chip_gen: v5e
topology: v5e:2x2
jax: 0.10.0
libtpu: 0.0.40
codegen_flags: <defaults>
</compile_context>

<pallas_src>
import jax
import jax.numpy as jnp
import numpy as np
from jax.experimental import pallas as pl
from jax.experimental.pallas import tpu as pltpu

LANES = 128
SUBLANES = 8


def xavier_uniform(key, shape):
    # torch.nn.init.xavier_uniform_ : U(-b, b), b = sqrt(6 / (fan_in + fan_out))
    bound = float(np.sqrt(6.0 / (shape[0] + shape[1])))
    return jax.random.uniform(key, shape, jnp.float32, -bound, bound)


def _round_up(n, m):
    return ((n + m - 1) // m) * m


def pack_params(params, n_hidden_sets, n_elements, task_names, B, S):
    """Pack every parameter (+ the set-pooling matrix) into one (R, W) slab.

    Each entry starts at a sublane-aligned row (multiple of 8) and lane 0.
    Returns (slab, layout, fused_head_width) with
    layout[name] = (row_offset, n_rows, n_cols) of the exact (unpadded) entry.
    """
    H, E = n_hidden_sets, n_elements
    entries = []
    for li, (w, b) in enumerate(params["ae"]):
        entries.append((f"ae_w{li}", np.asarray(w, np.float32)))
        entries.append((f"ae_b{li}", np.asarray(b, np.float32)))
    Wc = np.asarray(params["Wc"], np.float32)
    for e in range(E):
        # column (e * H + h) of Wc feeds element e -> contiguous H-wide slice
        entries.append((f"wc{e}", Wc[:, e * H:(e + 1) * H]))
    # (B, B*S) block-diagonal 0/1 matrix: pool @ m == sum over the set dim
    pool = np.kron(np.eye(B, dtype=np.float32), np.ones((1, S), np.float32))
    entries.append(("pool", pool))
    entries.append(("w1", np.asarray(params["W1"], np.float32)))
    entries.append(("b1", np.asarray(params["b1"], np.float32)))
    # fused task heads, lane-padded to a multiple of 128 for a dense out store
    head_w = np.concatenate(
        [np.asarray(params["heads"][n][0], np.float32) for n in task_names], 1)
    head_b = np.concatenate(
        [np.asarray(params["heads"][n][1], np.float32) for n in task_names], 1)
    out_w = max(LANES, _round_up(head_w.shape[1], LANES))
    head_w = np.pad(head_w, ((0, 0), (0, out_w - head_w.shape[1])))
    head_b = np.pad(head_b, ((0, 0), (0, out_w - head_b.shape[1])))
    entries.append(("head_w", head_w))
    entries.append(("head_b", head_b))

    width = max(LANES, _round_up(max(a.shape[1] for _, a in entries), LANES))
    layout, blocks, r = {}, [], 0
    for name, a in entries:
        nr, nc = a.shape
        layout[name] = (r, nr, nc)
        nr_pad = _round_up(nr, SUBLANES)
        blk = np.zeros((nr_pad, width), np.float32)
        blk[:nr, :nc] = a
        blocks.append(blk)
        r += nr_pad
    slab = jnp.asarray(np.concatenate(blocks, axis=0))
    return slab, layout, out_w


def make_kernel(layout, n_ae_layers, n_elements):
    """Builds the Pallas kernel body (closure over the static slab layout)."""

    def kernel(x_ref, p_ref, o_ref):
        def param(name):
            r, nr, nc = layout[name]
            return p_ref[r:r + nr, 0:nc]     # static, tile-aligned slice

        t = x_ref[...]                       # (B*S, D0) f32

        # --- base_network: stack of (Linear -> ReLU), y = x @ W + b ---
        for li in range(n_ae_layers):
            t = jnp.dot(t, param(f"ae_w{li}"),
                        preferred_element_type=jnp.float32)
            t = jnp.maximum(t + param(f"ae_b{li}"), 0.0)

        # --- relu(t @ Wc), then max over elements, as E lane-0 MXU matmuls
        #     reduced with a pure-VPU elementwise max ---
        m = None
        for e in range(n_elements):
            te = jnp.maximum(
                jnp.dot(t, param(f"wc{e}"),
                        preferred_element_type=jnp.float32), 0.0)
            m = te if m is None else jnp.maximum(m, te)   # (B*S, H)

        # --- sum over the set dim S: MXU matmul vs. block-diagonal pool ---
        s = jnp.dot(param("pool"), m,
                    preferred_element_type=jnp.float32)   # (B, H)

        # --- fc1 + ReLU ---
        h = jnp.maximum(
            jnp.dot(s, param("w1"), preferred_element_type=jnp.float32)
            + param("b1"), 0.0)                           # (B, 32)

        # --- fused task heads: one lane-dense (B, 128) store ---
        o_ref[...] = (
            jnp.dot(h, param("head_w"), preferred_element_type=jnp.float32)
            + param("head_b"))

    return kernel


def approx_rep_set_forward(x, params, n_hidden_sets, n_elements, task_names):
    """Wrapper: packs params, calls pallas_call once, returns {task: logits}."""
    B, S, D0 = x.shape
    x_flat = x.reshape(B * S, D0)
    slab, layout, out_w = pack_params(params, n_hidden_sets, n_elements,
                                      task_names, B, S)
    kernel = make_kernel(layout, len(params["ae"]), n_elements)
    vmem = pl.BlockSpec(memory_space=pltpu.MemorySpace.VMEM)
    # Single grid point: only two inputs (activations + one packed param slab),
    # one lane-dense output.  Everything is tiny and fully VMEM-resident.
    # For large B*S, add a grid over rows with dimension_semantics=("parallel",)
    # to use v7x's second TensorCore and keep VMEM bounded.
    y = pl.pallas_call(
        kernel,
        out_shape=jax.ShapeDtypeStruct((B, out_w), jnp.float32),
        in_specs=[vmem, vmem],
        out_specs=vmem,
    )(x_flat, slab)
    outs, c = {}, 0
    for name in task_names:
        nc = params["heads"][name][0].shape[1]
        outs[name] = y[:, c:c + nc]
        c += nc
    return outs


def reference_forward(x, params, n_hidden_sets, n_elements, task_names):
    """Pure-JAX mirror of the PyTorch forward, for correctness checking."""
    B, S, D = x.shape
    t = x.reshape(B * S, D)
    for w, b in params["ae"]:
        t = jax.nn.relu(t @ w + b)
    t = jax.nn.relu(t @ params["Wc"])
    t = t.reshape(B, S, n_elements, n_hidden_sets)
    t = jnp.max(t, axis=2)
    t = jnp.sum(t, axis=1)
    t = jax.nn.relu(t @ params["W1"] + params["b1"])
    return {n: t @ params["heads"][n][0] + params["heads"][n][1]
            for n in task_names}


if __name__ == "__main__":
    # Small shapes consistent with the module's forward:
    #   x: (batch=2, set_size=8, input_dim=16)
    B, S, input_dim = 2, 8, 16
    n_hidden_sets, n_elements = 8, 4
    autoencoder_layer_sizes = [input_dim, 32]            # BaseNetwork: 16 -> 32
    output_dims_dict = {"task_a": 3, "task_b": 5}
    task_names = list(output_dims_dict)

    key = jax.random.PRNGKey(0)
    keys = iter(jax.random.split(key, 16))

    # base_network params (Linear weights xavier-uniform, biases zero)
    ae = []
    for in_sz, out_sz in zip(autoencoder_layer_sizes[:-1],
                             autoencoder_layer_sizes[1:]):
        ae.append((xavier_uniform(next(keys), (in_sz, out_sz)),
                   jnp.zeros((1, out_sz), jnp.float32)))
    dim_after = autoencoder_layer_sizes[-1]

    Wc = xavier_uniform(next(keys), (dim_after, n_hidden_sets * n_elements))
    W1 = xavier_uniform(next(keys), (n_hidden_sets, 32))
    b1 = jnp.zeros((1, 32), jnp.float32)
    heads = {
        name: (xavier_uniform(next(keys), (32, nc)),
               jnp.zeros((1, nc), jnp.float32))
        for name, nc in output_dims_dict.items()
    }
    params = {"ae": ae, "Wc": Wc, "W1": W1, "b1": b1, "heads": heads}

    x = jax.random.normal(next(keys), (B, S, input_dim), jnp.float32)

    outs = approx_rep_set_forward(x, params, n_hidden_sets, n_elements,
                                  task_names)
    outs = {k: jax.block_until_ready(v) for k, v in outs.items()}

    ref = reference_forward(x, params, n_hidden_sets, n_elements, task_names)
    for name in task_names:
        np.testing.assert_allclose(np.asarray(outs[name]),
                                   np.asarray(ref[name]),
                                   rtol=1e-5, atol=1e-5)

    print("KERNEL_OK")
</pallas_src>

<mosaic_0001>
module attributes {stable_mosaic.version = 11 : i64} {
  func.func @kernel(%arg0: memref<16x16xf32, #tpu.memory_space<vmem>>, %arg1: memref<216x128xf32, #tpu.memory_space<vmem>>, %arg2: memref<2x128xf32, #tpu.memory_space<vmem>>) attributes {dimension_semantics = [], scalar_prefetch = 0 : i64, scratch_operands = 0 : i64, tpu.core_type = #tpu.core_type<tc>} {
    %c0 = arith.constant 0 : index
    %c0_0 = arith.constant 0 : index
    %0 = vector.load %arg0[%c0, %c0_0] : memref<16x16xf32, #tpu.memory_space<vmem>>, vector<16x16xf32>
    %c0_1 = arith.constant 0 : index
    %c0_2 = arith.constant 0 : index
    %1 = vector.load %arg1[%c0_1, %c0_2] : memref<216x128xf32, #tpu.memory_space<vmem>>, vector<16x32xf32>
    %cst = arith.constant dense<0.000000e+00> : vector<16x32xf32>
    %2 = tpu.matmul %0, %1, %cst {dimension_numbers = #tpu.dot_dimension_numbers<[1], [0], [0], [1], [0, 0, 1, 1], [], []>} : vector<16x16xf32>, vector<16x32xf32>, vector<16x32xf32> -> vector<16x32xf32>
    %c16 = arith.constant 16 : index
    %c0_3 = arith.constant 0 : index
    %3 = vector.load %arg1[%c16, %c0_3] : memref<216x128xf32, #tpu.memory_space<vmem>>, vector<1x32xf32>
    %4 = vector.broadcast %3 : vector<1x32xf32> to vector<16x32xf32>
    %5 = arith.addf %2, %4 : vector<16x32xf32>
    %cst_4 = arith.constant 0.000000e+00 : f32
    %6 = vector.broadcast %cst_4 : f32 to vector<16x32xf32>
    %7 = arith.maximumf %5, %6 : vector<16x32xf32>
    %c24 = arith.constant 24 : index
    %c0_5 = arith.constant 0 : index
    %8 = vector.load %arg1[%c24, %c0_5] : memref<216x128xf32, #tpu.memory_space<vmem>>, vector<32x8xf32>
    %cst_6 = arith.constant dense<0.000000e+00> : vector<16x8xf32>
    %9 = tpu.matmul %7, %8, %cst_6 {dimension_numbers = #tpu.dot_dimension_numbers<[1], [0], [0], [1], [0, 0, 1, 1], [], []>} : vector<16x32xf32>, vector<32x8xf32>, vector<16x8xf32> -> vector<16x8xf32>
    %cst_7 = arith.constant 0.000000e+00 : f32
    %10 = vector.broadcast %cst_7 : f32 to vector<16x8xf32>
    %11 = arith.maximumf %9, %10 : vector<16x8xf32>
    %c56 = arith.constant 56 : index
    %c0_8 = arith.constant 0 : index
    %12 = vector.load %arg1[%c56, %c0_8] : memref<216x128xf32, #tpu.memory_space<vmem>>, vector<32x8xf32>
    %cst_9 = arith.constant dense<0.000000e+00> : vector<16x8xf32>
    %13 = tpu.matmul %7, %12, %cst_9 {dimension_numbers = #tpu.dot_dimension_numbers<[1], [0], [0], [1], [0, 0, 1, 1], [], []>} : vector<16x32xf32>, vector<32x8xf32>, vector<16x8xf32> -> vector<16x8xf32>
    %cst_10 = arith.constant 0.000000e+00 : f32
    %14 = vector.broadcast %cst_10 : f32 to vector<16x8xf32>
    %15 = arith.maximumf %13, %14 : vector<16x8xf32>
    %16 = arith.maximumf %11, %15 : vector<16x8xf32>
    %c88 = arith.constant 88 : index
    %c0_11 = arith.constant 0 : index
    %17 = vector.load %arg1[%c88, %c0_11] : memref<216x128xf32, #tpu.memory_space<vmem>>, vector<32x8xf32>
    %cst_12 = arith.constant dense<0.000000e+00> : vector<16x8xf32>
    %18 = tpu.matmul %7, %17, %cst_12 {dimension_numbers = #tpu.dot_dimension_numbers<[1], [0], [0], [1], [0, 0, 1, 1], [], []>} : vector<16x32xf32>, vector<32x8xf32>, vector<16x8xf32> -> vector<16x8xf32>
    %cst_13 = arith.constant 0.000000e+00 : f32
    %19 = vector.broadcast %cst_13 : f32 to vector<16x8xf32>
    %20 = arith.maximumf %18, %19 : vector<16x8xf32>
    %21 = arith.maximumf %16, %20 : vector<16x8xf32>
    %c120 = arith.constant 120 : index
    %c0_14 = arith.constant 0 : index
    %22 = vector.load %arg1[%c120, %c0_14] : memref<216x128xf32, #tpu.memory_space<vmem>>, vector<32x8xf32>
    %cst_15 = arith.constant dense<0.000000e+00> : vector<16x8xf32>
    %23 = tpu.matmul %7, %22, %cst_15 {dimension_numbers = #tpu.dot_dimension_numbers<[1], [0], [0], [1], [0, 0, 1, 1], [], []>} : vector<16x32xf32>, vector<32x8xf32>, vector<16x8xf32> -> vector<16x8xf32>
    %cst_16 = arith.constant 0.000000e+00 : f32
    %24 = vector.broadcast %cst_16 : f32 to vector<16x8xf32>
    %25 = arith.maximumf %23, %24 : vector<16x8xf32>
    %26 = arith.maximumf %21, %25 : vector<16x8xf32>
    %c152 = arith.constant 152 : index
    %c0_17 = arith.constant 0 : index
    %27 = vector.load %arg1[%c152, %c0_17] : memref<216x128xf32, #tpu.memory_space<vmem>>, vector<2x16xf32>
    %cst_18 = arith.constant dense<0.000000e+00> : vector<2x8xf32>
    %28 = tpu.matmul %27, %26, %cst_18 {dimension_numbers = #tpu.dot_dimension_numbers<[1], [0], [0], [1], [0, 0, 1, 1], [], []>} : vector<2x16xf32>, vector<16x8xf32>, vector<2x8xf32> -> vector<2x8xf32>
    %c160 = arith.constant 160 : index
    %c0_19 = arith.constant 0 : index
    %29 = vector.load %arg1[%c160, %c0_19] : memref<216x128xf32, #tpu.memory_space<vmem>>, vector<8x32xf32>
    %cst_20 = arith.constant dense<0.000000e+00> : vector<2x32xf32>
    %30 = tpu.matmul %28, %29, %cst_20 {dimension_numbers = #tpu.dot_dimension_numbers<[1], [0], [0], [1], [0, 0, 1, 1], [], []>} : vector<2x8xf32>, vector<8x32xf32>, vector<2x32xf32> -> vector<2x32xf32>
    %c168 = arith.constant 168 : index
    %c0_21 = arith.constant 0 : index
    %31 = vector.load %arg1[%c168, %c0_21] : memref<216x128xf32, #tpu.memory_space<vmem>>, vector<1x32xf32>
    %32 = vector.broadcast %31 : vector<1x32xf32> to vector<2x32xf32>
    %33 = arith.addf %30, %32 : vector<2x32xf32>
    %cst_22 = arith.constant 0.000000e+00 : f32
    %34 = vector.broadcast %cst_22 : f32 to vector<2x32xf32>
    %35 = arith.maximumf %33, %34 : vector<2x32xf32>
    %c176 = arith.constant 176 : index
    %c0_23 = arith.constant 0 : index
    %36 = vector.load %arg1[%c176, %c0_23] : memref<216x128xf32, #tpu.memory_space<vmem>>, vector<32x128xf32>
    %cst_24 = arith.constant dense<0.000000e+00> : vector<2x128xf32>
    %37 = tpu.matmul %35, %36, %cst_24 {dimension_numbers = #tpu.dot_dimension_numbers<[1], [0], [0], [1], [0, 0, 1, 1], [], []>} : vector<2x32xf32>, vector<32x128xf32>, vector<2x128xf32> -> vector<2x128xf32>
    %c208 = arith.constant 208 : index
    %c0_25 = arith.constant 0 : index
    %38 = vector.load %arg1[%c208, %c0_25] : memref<216x128xf32, #tpu.memory_space<vmem>>, vector<1x128xf32>
    %39 = vector.broadcast %38 : vector<1x128xf32> to vector<2x128xf32>
    %40 = arith.addf %37, %39 : vector<2x128xf32>
    %c0_26 = arith.constant 0 : index
    %c0_27 = arith.constant 0 : index
    %41 = vector.load %arg2[%c0_26, %c0_27] : memref<2x128xf32, #tpu.memory_space<vmem>>, vector<2x128xf32>
    tpu.vector_store %arg2[%c0_26, %c0_27], %40 {strides = array<i32>} : memref<2x128xf32, #tpu.memory_space<vmem>>, vector<2x128xf32>,
    return
  }
}

</mosaic_0001>

<llo_original>
// kernel: tpu_custom_call.1
$region0: #{tpu_custom_call.1}
  #allocation0 [shape = 'u32[]', space=smem, size = 0x4, offset = 0x4, fixed_abs, tag = 'smem constant byte address 0x4 - core index']
  #allocation1 [shape = 'u32[72,128]{1,0:T(1,128)}', space=vmem, size = 0x9000, scoped, tag = 'internal scratch']
  %s0 = inlined_call_operand.hbm [shape: f32[16,16], index: 0, kind: input, shape index: {}]
  %s1 = inlined_call_operand.hbm [shape: f32[216,128], index: 1, kind: input, shape index: {}]
  %s2 = inlined_call_operand.hbm [shape: f32[2,128], index: 2, kind: output, shape index: {}]
  %s3 = sld [smem:[#allocation0]]
  $region26: #{tpu_custom_call.1} parent=0
    _
  %s5 = ssub.s32 1, %s3
  %s6 = scalar_select 0, %s5, %s3
  $region1: #{tpu_custom_call.1} parent=0
    #allocation2 [shape = 'u8[8192]{0}', space=vmem, size = 0x2000, scoped, tag = 'input window, operand 0, single buffered']
    #allocation3 [shape = 's32[1]{0}', space=sflag, size = 0x4, scoped, tag = 'scoped memory for tpu_custom_call.1']
    #allocation4 [shape = 's32[1]{0}', space=sflag, size = 0x4, scoped, tag = 'scoped memory for tpu_custom_call.1']
    #allocation5 [shape = 'u8[110592]{0}', space=vmem, size = 0x1b000, scoped, tag = 'input window, operand 1, single buffered']
    #allocation6 [shape = 's32[1]{0}', space=sflag, size = 0x4, scoped, tag = 'scoped memory for tpu_custom_call.1']
    #allocation7 [shape = 'u8[1024]{0}', space=vmem, size = 0x400, scoped, tag = 'output window, operand 0, single buffered']
    %7 = vsyncpa [#allocation3], 0
    %8 = vsyncpa [#allocation6], 0
    %9 = vsyncpa [#allocation4], 0
    // Predicated region
    $region2: #{tpu_custom_call.1} parent=1 // pred_check
      _
    $region3: #{tpu_custom_call.1} parent=1 // pred_check_branch
      %11 = sbr.rel (0) target = $region5
    $region4: #{tpu_custom_call.1} parent=1 // pred_region
      %13 = vsyncadd [#allocation3], 0
      %s14 = sshll.u32 %s0, 4
      %s15 = int_to_ptr.hbm [resolvable:$true] %s14
      %s16 = sshll.u32 [#allocation2], 4
      %s17 = int_to_ptr.vmem [resolvable:$true] %s16
      %22 = dma.hbm_to_vmem [thread:$0]  %s15, 256, %s17, [#allocation3], 128, 128, 8
    $region5: #{tpu_custom_call.1} parent=1 // pred_fallthru
      _
    // Predicated region
    $region6: #{tpu_custom_call.1} parent=1 // pred_check
      _
    $region7: #{tpu_custom_call.1} parent=1 // pred_check_branch
      %24 = sbr.rel (0) target = $region9
    $region8: #{tpu_custom_call.1} parent=1 // pred_region
      %26 = vsyncadd [#allocation6], 0
      %s27 = sshll.u32 %s1, 4
      %s28 = int_to_ptr.hbm [resolvable:$true] %s27
      %s29 = sshll.u32 [#allocation5], 4
      %s30 = int_to_ptr.vmem [resolvable:$true] %s29
      %35 = dma.hbm_to_vmem [thread:$0]  %s28, 3456, %s30, [#allocation6], 128, 128, 8
    $region9: #{tpu_custom_call.1} parent=1 // pred_fallthru
      _
    // Predicated region
    $region10: #{tpu_custom_call.1} parent=1 // pred_check
      _
    $region11: #{tpu_custom_call.1} parent=1 // pred_check_branch
      %37 = sbr.rel (0) target = $region13
    $region12: #{tpu_custom_call.1} parent=1 // pred_region
      %39 = dma.done [#allocation3], 256
    $region13: #{tpu_custom_call.1} parent=1 // pred_fallthru
      _
    // Predicated region
    $region14: #{tpu_custom_call.1} parent=1 // pred_check
      _
    $region15: #{tpu_custom_call.1} parent=1 // pred_check_branch
      %41 = sbr.rel (0) target = $region17
    $region16: #{tpu_custom_call.1} parent=1 // pred_region
      %43 = dma.done [#allocation6], 3456
    $region17: #{tpu_custom_call.1} parent=1 // pred_fallthru
      _
    %v44 = vld [vmem:[#allocation2] sm:$0xff]
    %v45 = vld [vmem:[#allocation2 + $0x8] sm:$0xff]
    %v46 = vld [vmem:[#allocation5] sm:$0xff]
    %v47 = vld [vmem:[#allocation5 + $0x8] sm:$0xff]
    %v48 = vld [vmem:[#allocation5 + $0x10] sm:$0x1]
    %v49 = vperm.slane %v48, 0
    %vm50 = vcmask 130048
    %v52 = vsel %vm50, %v44, 0
    %v55 = vsel %vm50, %v45, 0
    %57 = vmatpush.msra.mxu0 0.0
    %58 = vmatpush.msra.mxu0 0.0
    %59 = vmatpush.msra.mxu0 0.0
    %60 = vmatpush.msra.mxu0 0.0
    %61 = vmatpush.msra.mxu0 0.0
    %62 = vmatpush.msra.mxu0 0.0
    %63 = vmatpush.msra.mxu0 0.0
    %64 = vmatpush.msra.mxu0 0.0
    %65 = vmatpush.msra.mxu0 0.0
    %66 = vmatpush.msra.mxu0 0.0
    %67 = vmatpush.msra.mxu0 0.0
    %68 = vmatpush.msra.mxu0 0.0
    %69 = vmatpush.msra.mxu0 0.0
    %70 = vmatpush.msra.mxu0 0.0
    %71 = vmatpush.msra.mxu0 %v47
    %72 = vmatpush.msra.mxu0 %v46
    %73 = vmatmul.f32.gmra.mxu0 %v52
    %v74 = vpop.f32.mrf.mxu0
    %v75 = vadd.f32 %v49, %v74
    %76 = vmatmul.f32.gmra.mxu0 %v55
    %v77 = vpop.f32.mrf.mxu0
    %v78 = vadd.f32 %v49, %v77
    %79 = vdwg.mxu0
    %v80 = vmax.f32 %v75, 0.0
    %v81 = vmax.f32 %v78, 0.0
    %v82 = vld [vmem:[#allocation5 + $0x18] sm:$0xff]
    %v83 = vld [vmem:[#allocation5 + $0x20] sm:$0xff]
    %v84 = vld [vmem:[#allocation5 + $0x28] sm:$0xff]
    %v85 = vld [vmem:[#allocation5 + $0x30] sm:$0xff]
    %vm86 = vcmask 261120
    %v88 = vsel %vm86, %v80, 0
    %v91 = vsel %vm86, %v81, 0
    %93 = vmatpush.msra.mxu0 0.0
    %94 = vmatpush.msra.mxu0 0.0
    %95 = vmatpush.msra.mxu0 0.0
    %96 = vmatpush.msra.mxu0 0.0
    %97 = vmatpush.msra.mxu0 0.0
    %98 = vmatpush.msra.mxu0 0.0
    %99 = vmatpush.msra.mxu0 0.0
    %100 = vmatpush.msra.mxu0 0.0
    %101 = vmatpush.msra.mxu0 0.0
    %102 = vmatpush.msra.mxu0 0.0
    %103 = vmatpush.msra.mxu0 0.0
    %104 = vmatpush.msra.mxu0 0.0
    %105 = vmatpush.msra.mxu0 %v85
    %106 = vmatpush.msra.mxu0 %v84
    %107 = vmatpush.msra.mxu0 %v83
    %108 = vmatpush.msra.mxu0 %v82
    %109 = vmatmul.f32.gmra.mxu0 %v88
    %v110 = vpop.f32.mrf.mxu0
    %v111 = vadd.f32 0.0, %v110
    %112 = vmatmul.f32.gmra.mxu0 %v91
    %v113 = vpop.f32.mrf.mxu0
    %v114 = vadd.f32 0.0, %v113
    %115 = vdwg.mxu0
    %v116 = vmax.f32 %v111, 0.0
    %v117 = vmax.f32 %v114, 0.0
    %v118 = vld [vmem:[#allocation5 + $0x38] sm:$0xff]
    %v119 = vld [vmem:[#allocation5 + $0x40] sm:$0xff]
    %v120 = vld [vmem:[#allocation5 + $0x48] sm:$0xff]
    %v121 = vld [vmem:[#allocation5 + $0x50] sm:$0xff]
    %122 = vmatpush.msra.mxu0 0.0
    %123 = vmatpush.msra.mxu0 0.0
    %124 = vmatpush.msra.mxu0 0.0
    %125 = vmatpush.msra.mxu0 0.0
    %126 = vmatpush.msra.mxu0 0.0
    %127 = vmatpush.msra.mxu0 0.0
    %128 = vmatpush.msra.mxu0 0.0
    %129 = vmatpush.msra.mxu0 0.0
    %130 = vmatpush.msra.mxu0 0.0
    %131 = vmatpush.msra.mxu0 0.0
    %132 = vmatpush.msra.mxu0 0.0
    %133 = vmatpush.msra.mxu0 0.0
    %134 = vmatpush.msra.mxu0 %v121
    %135 = vmatpush.msra.mxu0 %v120
    %136 = vmatpush.msra.mxu0 %v119
    %137 = vmatpush.msra.mxu0 %v118
    %138 = vmatmul.f32.gmra.mxu0 %v88
    %v139 = vpop.f32.mrf.mxu0
    %v140 = vadd.f32 0.0, %v139
    %141 = vmatmul.f32.gmra.mxu0 %v91
    %v142 = vpop.f32.mrf.mxu0
    %v143 = vadd.f32 0.0, %v142
    %144 = vdwg.mxu0
    %v145 = vmax.f32 %v140, 0.0
    %v146 = vmax.f32 %v143, 0.0
    %v147 = vmax.f32 %v116, %v145
    %v148 = vmax.f32 %v117, %v146
    %v149 = vld [vmem:[#allocation5 + $0x58] sm:$0xff]
    %v150 = vld [vmem:[#allocation5 + $0x60] sm:$0xff]
    %v151 = vld [vmem:[#allocation5 + $0x68] sm:$0xff]
    %v152 = vld [vmem:[#allocation5 + $0x70] sm:$0xff]
    %153 = vmatpush.msra.mxu0 0.0
    %154 = vmatpush.msra.mxu0 0.0
    %155 = vmatpush.msra.mxu0 0.0
    %156 = vmatpush.msra.mxu0 0.0
    %157 = vmatpush.msra.mxu0 0.0
    %158 = vmatpush.msra.mxu0 0.0
    %159 = vmatpush.msra.mxu0 0.0
    %160 = vmatpush.msra.mxu0 0.0
    %161 = vmatpush.msra.mxu0 0.0
    %162 = vmatpush.msra.mxu0 0.0
    %163 = vmatpush.msra.mxu0 0.0
    %164 = vmatpush.msra.mxu0 0.0
    %165 = vmatpush.msra.mxu0 %v152
    %166 = vmatpush.msra.mxu0 %v151
    %167 = vmatpush.msra.mxu0 %v150
    %168 = vmatpush.msra.mxu0 %v149
    %169 = vmatmul.f32.gmra.mxu0 %v88
    %v170 = vpop.f32.mrf.mxu0
    %v171 = vadd.f32 0.0, %v170
    %172 = vmatmul.f32.gmra.mxu0 %v91
    %v173 = vpop.f32.mrf.mxu0
    %v174 = vadd.f32 0.0, %v173
    %175 = vdwg.mxu0
    %v176 = vmax.f32 %v171, 0.0
    %v177 = vmax.f32 %v174, 0.0
    %v178 = vmax.f32 %v147, %v176
    %v179 = vmax.f32 %v148, %v177
    %v180 = vld [vmem:[#allocation5 + $0x78] sm:$0xff]
    %v181 = vld [vmem:[#allocation5 + $0x80] sm:$0xff]
    %v182 = vld [vmem:[#allocation5 + $0x88] sm:$0xff]
    %v183 = vld [vmem:[#allocation5 + $0x90] sm:$0xff]
    %184 = vmatpush.msra.mxu0 0.0
    %185 = vmatpush.msra.mxu0 0.0
    %186 = vmatpush.msra.mxu0 0.0
    %187 = vmatpush.msra.mxu0 0.0
    %188 = vmatpush.msra.mxu0 0.0
    %189 = vmatpush.msra.mxu0 0.0
    %190 = vmatpush.msra.mxu0 0.0
    %191 = vmatpush.msra.mxu0 0.0
    %192 = vmatpush.msra.mxu0 0.0
    %193 = vmatpush.msra.mxu0 0.0
    %194 = vmatpush.msra.mxu0 0.0
    %195 = vmatpush.msra.mxu0 0.0
    %196 = vmatpush.msra.mxu0 %v183
    %197 = vmatpush.msra.mxu0 %v182
    %198 = vmatpush.msra.mxu0 %v181
    %199 = vmatpush.msra.mxu0 %v180
    %200 = vmatmul.f32.gmra.mxu0 %v88
    %v201 = vpop.f32.mrf.mxu0
    %v202 = vadd.f32 0.0, %v201
    %203 = vmatmul.f32.gmra.mxu0 %v91
    %v204 = vpop.f32.mrf.mxu0
    %v205 = vadd.f32 0.0, %v204
    %206 = vdwg.mxu0
    %v207 = vmax.f32 %v202, 0.0
    %v208 = vmax.f32 %v205, 0.0
    %v209 = vmax.f32 %v178, %v207
    %v210 = vmax.f32 %v179, %v208
    %v211 = vld [vmem:[#allocation5 + $0x98] sm:$0x3]
    %v213 = vsel %vm50, %v211, 0
    %215 = vmatpush.msra.mxu0 0.0
    %216 = vmatpush.msra.mxu0 0.0
    %217 = vmatpush.msra.mxu0 0.0
    %218 = vmatpush.msra.mxu0 0.0
    %219 = vmatpush.msra.mxu0 0.0
    %220 = vmatpush.msra.mxu0 0.0
    %221 = vmatpush.msra.mxu0 0.0
    %222 = vmatpush.msra.mxu0 0.0
    %223 = vmatpush.msra.mxu0 0.0
    %224 = vmatpush.msra.mxu0 0.0
    %225 = vmatpush.msra.mxu0 0.0
    %226 = vmatpush.msra.mxu0 0.0
    %227 = vmatpush.msra.mxu0 0.0
    %228 = vmatpush.msra.mxu0 0.0
    %229 = vmatpush.msra.mxu0 %v210
    %230 = vmatpush.msra.mxu0 %v209
    %231 = vmatmul.f32.gmra.mxu0 %v213
    %v232 = vpop.f32.mrf.mxu0
    %v233 = vadd.f32 0.0, %v232
    %234 = vdwg.mxu0
    %v235 = vld [vmem:[#allocation5 + $0xa0] sm:$0xff]
    %v236 = vld [vmem:[#allocation5 + $0xa8] sm:$0x1]
    %v237 = vperm.slane %v236, 0
    %vm238 = vcmask 64512
    %v240 = vsel %vm238, %v233, 0
    %242 = vmatpush.msra.mxu0 0.0
    %243 = vmatpush.msra.mxu0 0.0
    %244 = vmatpush.msra.mxu0 0.0
    %245 = vmatpush.msra.mxu0 0.0
    %246 = vmatpush.msra.mxu0 0.0
    %247 = vmatpush.msra.mxu0 0.0
    %248 = vmatpush.msra.mxu0 0.0
    %249 = vmatpush.msra.mxu0 0.0
    %250 = vmatpush.msra.mxu0 0.0
    %251 = vmatpush.msra.mxu0 0.0
    %252 = vmatpush.msra.mxu0 0.0
    %253 = vmatpush.msra.mxu0 0.0
    %254 = vmatpush.msra.mxu0 0.0
    %255 = vmatpush.msra.mxu0 0.0
    %256 = vmatpush.msra.mxu0 0.0
    %257 = vmatpush.msra.mxu0 %v235
    %258 = vmatmul.f32.gmra.mxu0 %v240
    %v259 = vpop.f32.mrf.mxu0
    %v260 = vadd.f32 %v237, %v259
    %261 = vdwg.mxu0
    %v262 = vmax.f32 %v260, 0.0
    %v263 = vld [vmem:[#allocation5 + $0xb0] sm:$0xff]
    %v264 = vld [vmem:[#allocation5 + $0xb8] sm:$0xff]
    %v265 = vld [vmem:[#allocation5 + $0xc0] sm:$0xff]
    %v266 = vld [vmem:[#allocation5 + $0xc8] sm:$0xff]
    %v267 = vld [vmem:[#allocation5 + $0xd0] sm:$0x1]
    %v268 = vperm.slane %v267, 0
    %v270 = vsel %vm86, %v262, 0
    %272 = vmatpush.msra.mxu0 0.0
    %273 = vmatpush.msra.mxu0 0.0
    %274 = vmatpush.msra.mxu0 0.0
    %275 = vmatpush.msra.mxu0 0.0
    %276 = vmatpush.msra.mxu0 0.0
    %277 = vmatpush.msra.mxu0 0.0
    %278 = vmatpush.msra.mxu0 0.0
    %279 = vmatpush.msra.mxu0 0.0
    %280 = vmatpush.msra.mxu0 0.0
    %281 = vmatpush.msra.mxu0 0.0
    %282 = vmatpush.msra.mxu0 0.0
    %283 = vmatpush.msra.mxu0 0.0
    %284 = vmatpush.msra.mxu0 %v266
    %285 = vmatpush.msra.mxu0 %v265
    %286 = vmatpush.msra.mxu0 %v264
    %287 = vmatpush.msra.mxu0 %v263
    %288 = vmatmul.f32.gmra.mxu0 %v270
    %v289 = vpop.f32.mrf.mxu0
    %v290 = vadd.f32 %v268, %v289
    %291 = vdwg.mxu0
    %292 = vst [vmem:[#allocation7] sm:$0x3] %v290
    // Predicated region
    $region18: #{tpu_custom_call.1} parent=1 // pred_check
      _
    $region19: #{tpu_custom_call.1} parent=1 // pred_check_branch
      %294 = sbr.rel (0) target = $region21
    $region20: #{tpu_custom_call.1} parent=1 // pred_region
      %296 = vsyncadd [#allocation4], 0
      %s298 = sshll.u32 [#allocation7], 4
      %s299 = int_to_ptr.vmem [resolvable:$true] %s298
      %s300 = sshll.u32 %s2, 4
      %s301 = int_to_ptr.hbm [resolvable:$true] %s300
      %303 = dma.vmem_to_hbm [thread:$0]  %s299, 32, %s301, [#allocation4]
    $region21: #{tpu_custom_call.1} parent=1 // pred_fallthru
      _
    // Predicated region
    $region22: #{tpu_custom_call.1} parent=1 // pred_check
      _
    $region23: #{tpu_custom_call.1} parent=1 // pred_check_branch
      %305 = sbr.rel (0) target = $region25
    $region24: #{tpu_custom_call.1} parent=1 // pred_region
      %307 = dma.done [#allocation4], 32
    $region25: #{tpu_custom_call.1} parent=1 // pred_fallthru
      _
    %308 = vsyncpa [#allocation3], 1
    %309 = vsyncpa [#allocation6], 1
    %310 = vsyncpa [#allocation4], 1

</llo_original>
